<compile_context>
chip_gen: v7x
topology: tpu7x:2x2x1
jax: 0.10.0
libtpu: 0.0.40
codegen_flags: <defaults>
</compile_context>

<pallas_src>
import jax
import jax.numpy as jnp
from jax import lax
from jax.experimental import pallas as pl
from jax.experimental.pallas import tpu as pltpu

KH = KW = 3
C_MID = 10   # conv output channels
POOL = 8     # AvgPool2d kernel size


def _model_kernel(x_ref, w1_ref, b1_ref, w2_ref, lb_ref, o_ref):
    # Conv2d (+ folded BN scale) as one dense matmul on the MXU: (B_TILE, HWC) x (HWC, COLS).
    y = jnp.dot(x_ref[...], w1_ref[...], preferred_element_type=jnp.float32)
    # Folded BN bias + ReLU on the VPU (f32).
    y = jnp.maximum(y + b1_ref[...], 0.0)
    # AvgPool2d((8,8)) + Linear folded into one matmul; f32 accumulate.
    out = jnp.dot(y.astype(jnp.bfloat16), w2_ref[...],
                  preferred_element_type=jnp.float32) + lb_ref[...]
    o_ref[...] = out.astype(o_ref.dtype)


def _round_up(n, m):
    return ((n + m - 1) // m) * m


def my_model_forward(x_nchw, conv_w, bn_gamma, bn_beta, bn_mean, bn_var,
                     lin_w, lin_b, eps=1e-5):
    N, Cin, H, W = x_nchw.shape
    OH, OW = H - KH + 1, W - KW + 1
    # AvgPool2d((8,8)) output must be 1x1 so that flatten() yields 10 features for Linear(10,.).
    assert OH // POOL == 1 and OW // POOL == 1, \
        "conv output spatial must be in [8, 15] per dim for AvgPool2d((8,8)) -> Linear(10, .)"
    out_dim = lin_w.shape[0]
    HWC = H * W * Cin
    COLS = OH * OW * C_MID

    # ---------------- parameter packing (plain JAX, one-time) ----------------
    scale = (bn_gamma.astype(jnp.float32) /
             jnp.sqrt(bn_var.astype(jnp.float32) + eps))
    bias = bn_beta.astype(jnp.float32) - bn_mean.astype(jnp.float32) * scale

    # W1: conv weight (BN scale folded) placed on an (H, W, Cin) canvas per output position:
    #   W1[h*W*Cin + w*Cin + c, (oh*OW + ow)*C_MID + f] = conv_w[f, c, h-oh, w-ow] * scale[f]
    # (zero outside the 3x3 window)  -> conv == x_flat @ W1.
    wk = conv_w.astype(jnp.float32) * scale[:, None, None, None]      # (C_MID, Cin, KH, KW)
    k_hwcf = jnp.transpose(wk, (2, 3, 1, 0))                          # (KH, KW, Cin, C_MID)
    canvas0 = jnp.zeros((H, W, Cin, C_MID), jnp.float32)
    cols = []
    for oh in range(OH):
        for ow in range(OW):
            canvas = lax.dynamic_update_slice(canvas0, k_hwcf, (oh, ow, 0, 0))
            cols.append(canvas.reshape(HWC, C_MID))
    w1 = jnp.concatenate(cols, axis=1).astype(jnp.bfloat16)           # (HWC, COLS)

    # Folded BN bias, tiled across the OH*OW spatial positions (kept in f32).
    b1 = jnp.tile(bias, OH * OW).reshape(1, COLS)

    # W2: AvgPool2d((8,8)) (top-left 8x8 window only) + Linear folded into one matmul.
    pool = jnp.zeros((OH, OW), jnp.float32).at[:POOL, :POOL].set(1.0 / (POOL * POOL))
    lw = jnp.transpose(lin_w).astype(jnp.float32)                     # (C_MID, out_dim)
    w2 = (pool[:, :, None, None] * lw[None, None, :, :]).reshape(COLS, out_dim)
    w2 = w2.astype(jnp.bfloat16)
    lb = lin_b.reshape(1, out_dim).astype(jnp.float32)

    # Raw NHWC image bytes, flattened per image; bf16 halves the dominant HBM stream.
    x_flat = jnp.transpose(x_nchw, (0, 2, 3, 1)).reshape(N, HWC).astype(jnp.bfloat16)

    # ---------------- batch tiling ----------------
    B_TILE = min(512, _round_up(N, 16))
    N_pad = _round_up(N, B_TILE)
    if N_pad != N:
        x_flat = jnp.pad(x_flat, ((0, N_pad - N), (0, 0)))
    n_blocks = N_pad // B_TILE

    out = pl.pallas_call(
        _model_kernel,
        out_shape=jax.ShapeDtypeStruct((N_pad, out_dim), jnp.float32),
        grid=(n_blocks,),
        in_specs=[
            pl.BlockSpec((B_TILE, HWC), lambda b: (b, 0)),     # per-tile raw images
            pl.BlockSpec((HWC, COLS), lambda b: (0, 0)),       # conv-as-matmul weight (BN folded)
            pl.BlockSpec((1, COLS), lambda b: (0, 0)),         # folded BN bias
            pl.BlockSpec((COLS, out_dim), lambda b: (0, 0)),   # pool+linear weight
            pl.BlockSpec((1, out_dim), lambda b: (0, 0)),      # linear bias
        ],
        out_specs=pl.BlockSpec((B_TILE, out_dim), lambda b: (b, 0)),
        compiler_params=pltpu.CompilerParams(dimension_semantics=("parallel",)),
    )(x_flat, w1, b1, w2, lb)
    return out[:N]


def _reference(x_nchw, conv_w, bn_gamma, bn_beta, bn_mean, bn_var, lin_w, lin_b, eps=1e-5):
    x_nhwc = jnp.transpose(x_nchw, (0, 2, 3, 1)).astype(jnp.float32)
    w_hwio = jnp.transpose(conv_w, (2, 3, 1, 0)).astype(jnp.float32)
    conv = lax.conv_general_dilated(
        x_nhwc, w_hwio, window_strides=(1, 1), padding="VALID",
        dimension_numbers=("NHWC", "HWIO", "NHWC"))
    scale = bn_gamma / jnp.sqrt(bn_var + eps)
    bias = bn_beta - bn_mean * scale
    y = jnp.maximum(conv * scale.reshape(1, 1, 1, -1) + bias.reshape(1, 1, 1, -1), 0.0)
    pooled = jnp.mean(y[:, :POOL, :POOL, :], axis=(1, 2))   # AvgPool2d((8,8)), single window at (0,0)
    return pooled @ lin_w.T + lin_b


if __name__ == "__main__":
    # AvgPool2d((8,8)) + Linear(10, out_dim) requires conv output spatial == 8..15;
    # use 10x10 input -> 8x8 conv output (exact pool coverage).
    N, CIN, H, W = 2, 4, 10, 10
    OUT_DIM = 8

    key = jax.random.PRNGKey(0)
    kx, kw, kg, kb, km, kv, klw, klb = jax.random.split(key, 8)

    x = jax.random.normal(kx, (N, CIN, H, W), dtype=jnp.float32)
    conv_w = 0.1 * jax.random.normal(kw, (C_MID, CIN, KH, KW), dtype=jnp.float32)
    bn_gamma = 1.0 + 0.1 * jax.random.normal(kg, (C_MID,), dtype=jnp.float32)
    bn_beta = 0.1 * jax.random.normal(kb, (C_MID,), dtype=jnp.float32)
    bn_mean = 0.05 * jax.random.normal(km, (C_MID,), dtype=jnp.float32)
    bn_var = 0.5 + jnp.abs(jax.random.normal(kv, (C_MID,), dtype=jnp.float32))
    lin_w = 0.2 * jax.random.normal(klw, (OUT_DIM, C_MID), dtype=jnp.float32)
    lin_b = 0.1 * jax.random.normal(klb, (OUT_DIM,), dtype=jnp.float32)

    out = my_model_forward(x, conv_w, bn_gamma, bn_beta, bn_mean, bn_var, lin_w, lin_b)
    out = jax.block_until_ready(out)

    ref = _reference(x, conv_w, bn_gamma, bn_beta, bn_mean, bn_var, lin_w, lin_b)
    ref = jax.block_until_ready(ref)

    assert out.shape == (N, OUT_DIM), out.shape
    # bf16 matmul operands (f32 accumulation) -> bf16-level tolerance vs the f32 reference.
    if not jnp.allclose(out, ref, rtol=2e-2, atol=2e-2):
        raise AssertionError(f"mismatch: max abs err {jnp.max(jnp.abs(out - ref))}")

    print("KERNEL_OK")
</pallas_src>

<mosaic_0001>
module attributes {stable_mosaic.version = 11 : i64} {
  func.func @_model_kernel(%arg0: i32, %arg1: memref<16x400xbf16, #tpu.memory_space<vmem>>, %arg2: memref<400x640xbf16, #tpu.memory_space<vmem>>, %arg3: memref<1x640xf32, #tpu.memory_space<vmem>>, %arg4: memref<640x8xbf16, #tpu.memory_space<vmem>>, %arg5: memref<1x8xf32, #tpu.memory_space<vmem>>, %arg6: memref<16x8xf32, #tpu.memory_space<vmem>>) attributes {dimension_semantics = [#tpu.dimension_semantics<parallel>], iteration_bounds = array<i64: 1>, scalar_prefetch = 0 : i64, scratch_operands = 0 : i64, tpu.core_type = #tpu.core_type<tc>, window_params = [{transform_indices = @transform_0, window_bounds = array<i64: 16, 400>}, {pipeline_mode = #tpu.pipeline_mode<synchronous>, transform_indices = @transform_1, window_bounds = array<i64: 400, 640>}, {pipeline_mode = #tpu.pipeline_mode<synchronous>, transform_indices = @transform_2, window_bounds = array<i64: 1, 640>}, {pipeline_mode = #tpu.pipeline_mode<synchronous>, transform_indices = @transform_3, window_bounds = array<i64: 640, 8>}, {pipeline_mode = #tpu.pipeline_mode<synchronous>, transform_indices = @transform_4, window_bounds = array<i64: 1, 8>}, {transform_indices = @transform_5, window_bounds = array<i64: 16, 8>}]} {
    %c0 = arith.constant 0 : index
    %c0_0 = arith.constant 0 : index
    %0 = vector.load %arg1[%c0, %c0_0] : memref<16x400xbf16, #tpu.memory_space<vmem>>, vector<16x400xbf16>
    %c0_1 = arith.constant 0 : index
    %c0_2 = arith.constant 0 : index
    %1 = vector.load %arg2[%c0_1, %c0_2] : memref<400x640xbf16, #tpu.memory_space<vmem>>, vector<400x640xbf16>
    %cst = arith.constant dense<0.000000e+00> : vector<16x640xf32>
    %2 = tpu.matmul %0, %1, %cst {dimension_numbers = #tpu.dot_dimension_numbers<[1], [0], [0], [1], [0, 0, 1, 1], [], []>} : vector<16x400xbf16>, vector<400x640xbf16>, vector<16x640xf32> -> vector<16x640xf32>
    %c0_3 = arith.constant 0 : index
    %c0_4 = arith.constant 0 : index
    %3 = vector.load %arg3[%c0_3, %c0_4] : memref<1x640xf32, #tpu.memory_space<vmem>>, vector<1x640xf32>
    %4 = vector.broadcast %3 : vector<1x640xf32> to vector<16x640xf32>
    %5 = arith.addf %2, %4 : vector<16x640xf32>
    %cst_5 = arith.constant 0.000000e+00 : f32
    %6 = vector.broadcast %cst_5 : f32 to vector<16x640xf32>
    %7 = arith.maximumf %5, %6 : vector<16x640xf32>
    %8 = arith.truncf %7 : vector<16x640xf32> to vector<16x640xbf16>
    %c0_6 = arith.constant 0 : index
    %c0_7 = arith.constant 0 : index
    %9 = vector.load %arg4[%c0_6, %c0_7] : memref<640x8xbf16, #tpu.memory_space<vmem>>, vector<640x8xbf16>
    %cst_8 = arith.constant dense<0.000000e+00> : vector<16x8xf32>
    %10 = tpu.matmul %8, %9, %cst_8 {dimension_numbers = #tpu.dot_dimension_numbers<[1], [0], [0], [1], [0, 0, 1, 1], [], []>} : vector<16x640xbf16>, vector<640x8xbf16>, vector<16x8xf32> -> vector<16x8xf32>
    %c0_9 = arith.constant 0 : index
    %c0_10 = arith.constant 0 : index
    %11 = vector.load %arg5[%c0_9, %c0_10] : memref<1x8xf32, #tpu.memory_space<vmem>>, vector<1x8xf32>
    %12 = vector.broadcast %11 : vector<1x8xf32> to vector<16x8xf32>
    %13 = arith.addf %10, %12 : vector<16x8xf32>
    %c0_11 = arith.constant 0 : index
    %c0_12 = arith.constant 0 : index
    %14 = vector.load %arg6[%c0_11, %c0_12] : memref<16x8xf32, #tpu.memory_space<vmem>>, vector<16x8xf32>
    tpu.vector_store %arg6[%c0_11, %c0_12], %13 {strides = array<i32>} : memref<16x8xf32, #tpu.memory_space<vmem>>, vector<16x8xf32>,
    return
  }
  func.func @transform_0(%arg0: i32) -> (i32, i32) {
    %c0_i32 = arith.constant 0 : i32
    %c0_i32_0 = arith.constant 0 : i32
    return %arg0, %c0_i32 : i32, i32
  }
  func.func @transform_1(%arg0: i32) -> (i32, i32) {
    %c0_i32 = arith.constant 0 : i32
    %c0_i32_0 = arith.constant 0 : i32
    %c0_i32_1 = arith.constant 0 : i32
    return %c0_i32, %c0_i32_0 : i32, i32
  }
  func.func @transform_2(%arg0: i32) -> (i32, i32) {
    %c0_i32 = arith.constant 0 : i32
    %c0_i32_0 = arith.constant 0 : i32
    %c0_i32_1 = arith.constant 0 : i32
    return %c0_i32, %c0_i32_0 : i32, i32
  }
  func.func @transform_3(%arg0: i32) -> (i32, i32) {
    %c0_i32 = arith.constant 0 : i32
    %c0_i32_0 = arith.constant 0 : i32
    %c0_i32_1 = arith.constant 0 : i32
    return %c0_i32, %c0_i32_0 : i32, i32
  }
  func.func @transform_4(%arg0: i32) -> (i32, i32) {
    %c0_i32 = arith.constant 0 : i32
    %c0_i32_0 = arith.constant 0 : i32
    %c0_i32_1 = arith.constant 0 : i32
    return %c0_i32, %c0_i32_0 : i32, i32
  }
  func.func @transform_5(%arg0: i32) -> (i32, i32) {
    %c0_i32 = arith.constant 0 : i32
    %c0_i32_0 = arith.constant 0 : i32
    return %arg0, %c0_i32 : i32, i32
  }
}

</mosaic_0001>

<llo_original>
// kernel: tpu_custom_call.1
$region0: #{tpu_custom_call.1}
  #allocation0 [shape = 'u32[]', space=smem, size = 0x4, offset = 0x4, fixed_abs, tag = 'smem constant byte address 0x4 - core index']
  #allocation1 [shape = 'u32[144,128]{1,0:T(1,128)}', space=vmem, size = 0x12000, scoped, tag = 'internal scratch']
  %s0 = inlined_call_operand.vmem [shape: bf16[16,400], index: 0, kind: input, shape index: {}]
  %s1 = inlined_call_operand.hbm [shape: bf16[400,640], index: 1, kind: input, shape index: {}]
  %s2 = inlined_call_operand.vmem [shape: f32[1,640], index: 2, kind: input, shape index: {}]
  %s3 = inlined_call_operand.vmem [shape: bf16[640,8], index: 3, kind: input, shape index: {}]
  %s4 = inlined_call_operand.vmem [shape: f32[1,8], index: 4, kind: input, shape index: {}]
  %s5 = inlined_call_operand.vmem [shape: f32[16,8], index: 5, kind: output, shape index: {}]
  %s6 = sld [smem:[#allocation0]]
  $region34: #{tpu_custom_call.1} parent=0
    _
  %s8 = ssub.s32 1, %s6
  %s9 = scalar_select 0, %s8, %s6
  $region1: #{tpu_custom_call.1} parent=0
    #allocation2 [shape = 'u8[512000]{0}', space=vmem, size = 0x7d000, scoped, tag = 'input window, operand 1, single buffered']
    #allocation3 [shape = 's32[1]{0}', space=sflag, size = 0x4, scoped, tag = 'scoped memory for tpu_custom_call.1']
    %10 = vsyncpa [#allocation3], 0
    // Predicated region
    $region2: #{tpu_custom_call.1} parent=1 // pred_check
      _
    $region3: #{tpu_custom_call.1} parent=1 // pred_check_branch
      %12 = sbr.rel (0) target = $region5
    $region4: #{tpu_custom_call.1} parent=1 // pred_region
      _
    $region5: #{tpu_custom_call.1} parent=1 // pred_fallthru
      _
    // Predicated region
    $region6: #{tpu_custom_call.1} parent=1 // pred_check
      _
    $region7: #{tpu_custom_call.1} parent=1 // pred_check_branch
      %14 = sbr.rel (0) target = $region9
    $region8: #{tpu_custom_call.1} parent=1 // pred_region
      %s16 = ssub.s32 16000, 16000
      %17 = vsyncadd [#allocation3], %s16
      %s18 = sshll.u32 [#allocation2], 4
      %s19 = int_to_ptr.vmem [resolvable:$true] %s18
      %24 = dma.hbm_to_vmem [thread:$0]  %s1, 16000, %s19, [#allocation3], 320, 320, 20
    $region9: #{tpu_custom_call.1} parent=1 // pred_fallthru
      _
    // Predicated region
    $region10: #{tpu_custom_call.1} parent=1 // pred_check
      _
    $region11: #{tpu_custom_call.1} parent=1 // pred_check_branch
      %26 = sbr.rel (0) target = $region13
    $region12: #{tpu_custom_call.1} parent=1 // pred_region
      _
    $region13: #{tpu_custom_call.1} parent=1 // pred_fallthru
      _
    // Predicated region
    $region14: #{tpu_custom_call.1} parent=1 // pred_check
      _
    $region15: #{tpu_custom_call.1} parent=1 // pred_check_branch
      %28 = sbr.rel (0) target = $region17
    $region16: #{tpu_custom_call.1} parent=1 // pred_region
      _
    $region17: #{tpu_custom_call.1} parent=1 // pred_fallthru
      _
    // Predicated region
    $region18: #{tpu_custom_call.1} parent=1 // pred_check
      _
    $region19: #{tpu_custom_call.1} parent=1 // pred_check_branch
      %30 = sbr.rel (0) target = $region21
    $region20: #{tpu_custom_call.1} parent=1 // pred_region
      _
    $region21: #{tpu_custom_call.1} parent=1 // pred_fallthru
      _
    // Predicated region
    $region22: #{tpu_custom_call.1} parent=1 // pred_check
      _
    $region23: #{tpu_custom_call.1} parent=1 // pred_check_branch
      %32 = sbr.rel (0) target = $region25
    $region24: #{tpu_custom_call.1} parent=1 // pred_region
      %33 = dma.done [#allocation3], 16000
    $region25: #{tpu_custom_call.1} parent=1 // pred_fallthru
      _
    %v35 = vld [vmem:[%s0] sm:$0xff]
    %v36 = vld [vmem:[%s0 + $0x8] sm:$0xff]
    %v37 = vld [vmem:[%s0 + $0x10] sm:$0xff]
    %v38 = vld [vmem:[%s0 + $0x18] sm:$0xff]
    %v39 = vld [vmem:[#allocation2] sm:$0xff]
    %v40 = vld [vmem:[#allocation2 + $0x8] sm:$0xff]
    %v41 = vld [vmem:[#allocation2 + $0x10] sm:$0xf]
    %v42 = vld [vmem:[#allocation2 + $0x14] sm:$0xff]
    %v43 = vld [vmem:[#allocation2 + $0x1c] sm:$0xff]
    %v44 = vld [vmem:[#allocation2 + $0x24] sm:$0xf]
    %v45 = vld [vmem:[#allocation2 + $0x28] sm:$0xff]
    %v46 = vld [vmem:[#allocation2 + $0x30] sm:$0xff]
    %v47 = vld [vmem:[#allocation2 + $0x38] sm:$0xf]
    %v48 = vld [vmem:[#allocation2 + $0x3c] sm:$0xff]
    %v49 = vld [vmem:[#allocation2 + $0x44] sm:$0xff]
    %v50 = vld [vmem:[#allocation2 + $0x4c] sm:$0xf]
    %v51 = vld [vmem:[#allocation2 + $0x50] sm:$0xff]
    %v52 = vld [vmem:[#allocation2 + $0x58] sm:$0xff]
    %v53 = vld [vmem:[#allocation2 + $0x60] sm:$0xf]
    %v54 = vld [vmem:[#allocation2 + $0x64] sm:$0xff]
    %v55 = vld [vmem:[#allocation2 + $0x6c] sm:$0xff]
    %v56 = vld [vmem:[#allocation2 + $0x74] sm:$0xf]
    %v57 = vld [vmem:[#allocation2 + $0x78] sm:$0xff]
    %v58 = vld [vmem:[#allocation2 + $0x80] sm:$0xff]
    %v59 = vld [vmem:[#allocation2 + $0x88] sm:$0xf]
    %v60 = vld [vmem:[#allocation2 + $0x8c] sm:$0xff]
    %v61 = vld [vmem:[#allocation2 + $0x94] sm:$0xff]
    %v62 = vld [vmem:[#allocation2 + $0x9c] sm:$0xf]
    %v63 = vld [vmem:[#allocation2 + $0xa0] sm:$0xff]
    %v64 = vld [vmem:[#allocation2 + $0xa8] sm:$0xff]
    %v65 = vld [vmem:[#allocation2 + $0xb0] sm:$0xf]
    %v66 = vld [vmem:[#allocation2 + $0xb4] sm:$0xff]
    %v67 = vld [vmem:[#allocation2 + $0xbc] sm:$0xff]
    %v68 = vld [vmem:[#allocation2 + $0xc4] sm:$0xf]
    %v69 = vld [vmem:[#allocation2 + $0xc8] sm:$0xff]
    %v70 = vld [vmem:[#allocation2 + $0xd0] sm:$0xff]
    %v71 = vld [vmem:[#allocation2 + $0xd8] sm:$0xf]
    %v72 = vld [vmem:[#allocation2 + $0xdc] sm:$0xff]
    %v73 = vld [vmem:[#allocation2 + $0xe4] sm:$0xff]
    %v74 = vld [vmem:[#allocation2 + $0xec] sm:$0xf]
    %v75 = vld [vmem:[#allocation2 + $0xf0] sm:$0xff]
    %v76 = vld [vmem:[#allocation2 + $0xf8] sm:$0xff]
    %v77 = vld [vmem:[#allocation2 + $0x100] sm:$0xf]
    %v78 = vld [vmem:[#allocation2 + $0x104] sm:$0xff]
    %v79 = vld [vmem:[#allocation2 + $0x10c] sm:$0xff]
    %v80 = vld [vmem:[#allocation2 + $0x114] sm:$0xf]
    %v81 = vld [vmem:[#allocation2 + $0x118] sm:$0xff]
    %v82 = vld [vmem:[#allocation2 + $0x120] sm:$0xff]
    %v83 = vld [vmem:[#allocation2 + $0x128] sm:$0xf]
    %v84 = vld [vmem:[#allocation2 + $0x12c] sm:$0xff]
    %v85 = vld [vmem:[#allocation2 + $0x134] sm:$0xff]
    %v86 = vld [vmem:[#allocation2 + $0x13c] sm:$0xf]
    %v87 = vld [vmem:[#allocation2 + $0x140] sm:$0xff]
    %v88 = vld [vmem:[#allocation2 + $0x148] sm:$0xff]
    %v89 = vld [vmem:[#allocation2 + $0x150] sm:$0xf]
    %v90 = vld [vmem:[#allocation2 + $0x154] sm:$0xff]
    %v91 = vld [vmem:[#allocation2 + $0x15c] sm:$0xff]
    %v92 = vld [vmem:[#allocation2 + $0x164] sm:$0xf]
    %v93 = vld [vmem:[#allocation2 + $0x168] sm:$0xff]
    %v94 = vld [vmem:[#allocation2 + $0x170] sm:$0xff]
    %v95 = vld [vmem:[#allocation2 + $0x178] sm:$0xf]
    %v96 = vld [vmem:[#allocation2 + $0x17c] sm:$0xff]
    %v97 = vld [vmem:[#allocation2 + $0x184] sm:$0xff]
    %v98 = vld [vmem:[#allocation2 + $0x18c] sm:$0xf]
    %v99 = vld [vmem:[#allocation2 + $0x190] sm:$0xff]
    %v100 = vld [vmem:[#allocation2 + $0x198] sm:$0xff]
    %v101 = vld [vmem:[#allocation2 + $0x1a0] sm:$0xf]
    %v102 = vld [vmem:[#allocation2 + $0x1a4] sm:$0xff]
    %v103 = vld [vmem:[#allocation2 + $0x1ac] sm:$0xff]
    %v104 = vld [vmem:[#allocation2 + $0x1b4] sm:$0xf]
    %v105 = vld [vmem:[#allocation2 + $0x1b8] sm:$0xff]
    %v106 = vld [vmem:[#allocation2 + $0x1c0] sm:$0xff]
    %v107 = vld [vmem:[#allocation2 + $0x1c8] sm:$0xf]
    %v108 = vld [vmem:[#allocation2 + $0x1cc] sm:$0xff]
    %v109 = vld [vmem:[#allocation2 + $0x1d4] sm:$0xff]
    %v110 = vld [vmem:[#allocation2 + $0x1dc] sm:$0xf]
    %v111 = vld [vmem:[#allocation2 + $0x1e0] sm:$0xff]
    %v112 = vld [vmem:[#allocation2 + $0x1e8] sm:$0xff]
    %v113 = vld [vmem:[#allocation2 + $0x1f0] sm:$0xf]
    %v114 = vld [vmem:[#allocation2 + $0x1f4] sm:$0xff]
    %v115 = vld [vmem:[#allocation2 + $0x1fc] sm:$0xff]
    %v116 = vld [vmem:[#allocation2 + $0x204] sm:$0xf]
    %v117 = vld [vmem:[#allocation2 + $0x208] sm:$0xff]
    %v118 = vld [vmem:[#allocation2 + $0x210] sm:$0xff]
    %v119 = vld [vmem:[#allocation2 + $0x218] sm:$0xf]
    %v120 = vld [vmem:[#allocation2 + $0x21c] sm:$0xff]
    %v121 = vld [vmem:[#allocation2 + $0x224] sm:$0xff]
    %v122 = vld [vmem:[#allocation2 + $0x22c] sm:$0xf]
    %v123 = vld [vmem:[#allocation2 + $0x230] sm:$0xff]
    %v124 = vld [vmem:[#allocation2 + $0x238] sm:$0xff]
    %v125 = vld [vmem:[#allocation2 + $0x240] sm:$0xf]
    %v126 = vld [vmem:[#allocation2 + $0x244] sm:$0xff]
    %v127 = vld [vmem:[#allocation2 + $0x24c] sm:$0xff]
    %v128 = vld [vmem:[#allocation2 + $0x254] sm:$0xf]
    %v129 = vld [vmem:[#allocation2 + $0x258] sm:$0xff]
    %v130 = vld [vmem:[#allocation2 + $0x260] sm:$0xff]
    %v131 = vld [vmem:[#allocation2 + $0x268] sm:$0xf]
    %v132 = vld [vmem:[#allocation2 + $0x26c] sm:$0xff]
    %v133 = vld [vmem:[#allocation2 + $0x274] sm:$0xff]
    %v134 = vld [vmem:[#allocation2 + $0x27c] sm:$0xf]
    %v135 = vld [vmem:[#allocation2 + $0x280] sm:$0xff]
    %v136 = vld [vmem:[#allocation2 + $0x288] sm:$0xff]
    %v137 = vld [vmem:[#allocation2 + $0x290] sm:$0xf]
    %v138 = vld [vmem:[#allocation2 + $0x294] sm:$0xff]
    %v139 = vld [vmem:[#allocation2 + $0x29c] sm:$0xff]
    %v140 = vld [vmem:[#allocation2 + $0x2a4] sm:$0xf]
    %v141 = vld [vmem:[#allocation2 + $0x2a8] sm:$0xff]
    %v142 = vld [vmem:[#allocation2 + $0x2b0] sm:$0xff]
    %v143 = vld [vmem:[#allocation2 + $0x2b8] sm:$0xf]
    %v144 = vld [vmem:[#allocation2 + $0x2bc] sm:$0xff]
    %v145 = vld [vmem:[#allocation2 + $0x2c4] sm:$0xff]
    %v146 = vld [vmem:[#allocation2 + $0x2cc] sm:$0xf]
    %v147 = vld [vmem:[#allocation2 + $0x2d0] sm:$0xff]
    %v148 = vld [vmem:[#allocation2 + $0x2d8] sm:$0xff]
    %v149 = vld [vmem:[#allocation2 + $0x2e0] sm:$0xf]
    %v150 = vld [vmem:[#allocation2 + $0x2e4] sm:$0xff]
    %v151 = vld [vmem:[#allocation2 + $0x2ec] sm:$0xff]
    %v152 = vld [vmem:[#allocation2 + $0x2f4] sm:$0xf]
    %v153 = vld [vmem:[#allocation2 + $0x2f8] sm:$0xff]
    %v154 = vld [vmem:[#allocation2 + $0x300] sm:$0xff]
    %v155 = vld [vmem:[#allocation2 + $0x308] sm:$0xf]
    %v156 = vld [vmem:[#allocation2 + $0x30c] sm:$0xff]
    %v157 = vld [vmem:[#allocation2 + $0x314] sm:$0xff]
    %v158 = vld [vmem:[#allocation2 + $0x31c] sm:$0xf]
    %v159 = vld [vmem:[#allocation2 + $0x320] sm:$0xff]
    %v160 = vld [vmem:[#allocation2 + $0x328] sm:$0xff]
    %v161 = vld [vmem:[#allocation2 + $0x330] sm:$0xf]
    %v162 = vld [vmem:[#allocation2 + $0x334] sm:$0xff]
    %v163 = vld [vmem:[#allocation2 + $0x33c] sm:$0xff]
    %v164 = vld [vmem:[#allocation2 + $0x344] sm:$0xf]
    %v165 = vld [vmem:[#allocation2 + $0x348] sm:$0xff]
    %v166 = vld [vmem:[#allocation2 + $0x350] sm:$0xff]
    %v167 = vld [vmem:[#allocation2 + $0x358] sm:$0xf]
    %v168 = vld [vmem:[#allocation2 + $0x35c] sm:$0xff]
    %v169 = vld [vmem:[#allocation2 + $0x364] sm:$0xff]
    %v170 = vld [vmem:[#allocation2 + $0x36c] sm:$0xf]
    %v171 = vld [vmem:[#allocation2 + $0x370] sm:$0xff]
    %v172 = vld [vmem:[#allocation2 + $0x378] sm:$0xff]
    %v173 = vld [vmem:[#allocation2 + $0x380] sm:$0xf]
    %v174 = vld [vmem:[#allocation2 + $0x384] sm:$0xff]
    %v175 = vld [vmem:[#allocation2 + $0x38c] sm:$0xff]
    %v176 = vld [vmem:[#allocation2 + $0x394] sm:$0xf]
    %v177 = vld [vmem:[#allocation2 + $0x398] sm:$0xff]
    %v178 = vld [vmem:[#allocation2 + $0x3a0] sm:$0xff]
    %v179 = vld [vmem:[#allocation2 + $0x3a8] sm:$0xf]
    %v180 = vld [vmem:[#allocation2 + $0x3ac] sm:$0xff]
    %v181 = vld [vmem:[#allocation2 + $0x3b4] sm:$0xff]
    %v182 = vld [vmem:[#allocation2 + $0x3bc] sm:$0xf]
    %v183 = vld [vmem:[#allocation2 + $0x3c0] sm:$0xff]
    %v184 = vld [vmem:[#allocation2 + $0x3c8] sm:$0xff]
    %v185 = vld [vmem:[#allocation2 + $0x3d0] sm:$0xf]
    %v186 = vld [vmem:[#allocation2 + $0x3d4] sm:$0xff]
    %v187 = vld [vmem:[#allocation2 + $0x3dc] sm:$0xff]
    %v188 = vld [vmem:[#allocation2 + $0x3e4] sm:$0xf]
    %v189 = vld [vmem:[%s2] sm:$0x1f]
    %v191 = vlaneseq
    %v192 = vshrl.u32 %v191, 7
    %v193 = vsub.s32 0, %v192
    %v194 = vrot.slane %v189, %v193
    %v195 = vlaneseq
    %v196 = vshrl.u32 %v195, 7
    %v197 = vsub.s32 1, %v196
    %v198 = vrot.slane %v189, %v197
    %v199 = vlaneseq
    %v200 = vshrl.u32 %v199, 7
    %v201 = vsub.s32 2, %v200
    %v202 = vrot.slane %v189, %v201
    %v203 = vlaneseq
    %v204 = vshrl.u32 %v203, 7
    %v205 = vsub.s32 3, %v204
    %v206 = vrot.slane %v189, %v205
    %v207 = vlaneseq
    %v208 = vshrl.u32 %v207, 7
    %v209 = vsub.s32 4, %v208
    %v210 = vrot.slane %v189, %v209
    %v220 = vunpack.c.l.b16 %v35
    %v221 = vunpack.c.h.b16 %v35
    %v222 = vunpack.c.l.b16 %v36
    %v223 = vunpack.c.h.b16 %v36
    %v224 = vunpack.c.l.b16 %v37
    %v225 = vunpack.c.h.b16 %v37
    %v226 = vunpack.c.l.b16 %v38
    %v227 = vunpack.c.h.b16 %v38
    %v228 = vpack.c.b16 %v224, %v220
    %v229 = vpack.c.b16 %v225, %v221
    %v230 = vpack.c.b16 %v226, %v222
    %v231 = vpack.c.b16 %v227, %v223
    %v385 = vunpack.c.l.b16 %v39
    %v386 = vunpack.c.h.b16 %v39
    %v387 = vunpack.c.l.b16 %v40
    %v388 = vunpack.c.h.b16 %v40
    %v389 = vunpack.c.l.b16 %v41
    %v390 = vunpack.c.l.b16 %v42
    %v391 = vunpack.c.h.b16 %v42
    %v392 = vunpack.c.l.b16 %v43
    %v393 = vunpack.c.h.b16 %v43
    %v394 = vunpack.c.l.b16 %v44
    %v395 = vunpack.c.l.b16 %v45
    %v396 = vunpack.c.h.b16 %v45
    %v397 = vunpack.c.l.b16 %v46
    %v398 = vunpack.c.h.b16 %v46
    %v399 = vunpack.c.l.b16 %v47
    %v400 = vunpack.c.l.b16 %v48
    %v401 = vunpack.c.h.b16 %v48
    %v402 = vunpack.c.l.b16 %v49
    %v403 = vunpack.c.h.b16 %v49
    %v404 = vunpack.c.l.b16 %v50
    %v405 = vunpack.c.l.b16 %v51
    %v406 = vunpack.c.h.b16 %v51
    %v407 = vunpack.c.l.b16 %v52
    %v408 = vunpack.c.h.b16 %v52
    %v409 = vunpack.c.l.b16 %v53
    %v410 = vunpack.c.l.b16 %v54
    %v411 = vunpack.c.h.b16 %v54
    %v412 = vunpack.c.l.b16 %v55
    %v413 = vunpack.c.h.b16 %v55
    %v414 = vunpack.c.l.b16 %v56
    %v415 = vunpack.c.l.b16 %v57
    %v416 = vunpack.c.h.b16 %v57
    %v417 = vunpack.c.l.b16 %v58
    %v418 = vunpack.c.h.b16 %v58
    %v419 = vunpack.c.l.b16 %v59
    %v420 = vunpack.c.l.b16 %v60
    %v421 = vunpack.c.h.b16 %v60
    %v422 = vunpack.c.l.b16 %v61
    %v423 = vunpack.c.h.b16 %v61
    %v424 = vunpack.c.l.b16 %v62
    %v425 = vunpack.c.l.b16 %v63
    %v426 = vunpack.c.h.b16 %v63
    %v427 = vunpack.c.l.b16 %v64
    %v428 = vunpack.c.h.b16 %v64
    %v429 = vunpack.c.l.b16 %v65
    %v430 = vunpack.c.l.b16 %v66
    %v431 = vunpack.c.h.b16 %v66
    %v432 = vunpack.c.l.b16 %v67
    %v433 = vunpack.c.h.b16 %v67
    %v434 = vunpack.c.l.b16 %v68
    %v435 = vunpack.c.l.b16 %v69
    %v436 = vunpack.c.h.b16 %v69
    %v437 = vunpack.c.l.b16 %v70
    %v438 = vunpack.c.h.b16 %v70
    %v439 = vunpack.c.l.b16 %v71
    %v440 = vunpack.c.l.b16 %v72
    %v441 = vunpack.c.h.b16 %v72
    %v442 = vunpack.c.l.b16 %v73
    %v443 = vunpack.c.h.b16 %v73
    %v444 = vunpack.c.l.b16 %v74
    %v445 = vunpack.c.l.b16 %v75
    %v446 = vunpack.c.h.b16 %v75
    %v447 = vunpack.c.l.b16 %v76
    %v448 = vunpack.c.h.b16 %v76
    %v449 = vunpack.c.l.b16 %v77
    %v450 = vunpack.c.l.b16 %v78
    %v451 = vunpack.c.h.b16 %v78
    %v452 = vunpack.c.l.b16 %v79
    %v453 = vunpack.c.h.b16 %v79
    %v454 = vunpack.c.l.b16 %v80
    %v455 = vunpack.c.l.b16 %v81
    %v456 = vunpack.c.h.b16 %v81
    %v457 = vunpack.c.l.b16 %v82
    %v458 = vunpack.c.h.b16 %v82
    %v459 = vunpack.c.l.b16 %v83
    %v460 = vunpack.c.l.b16 %v84
    %v461 = vunpack.c.h.b16 %v84
    %v462 = vunpack.c.l.b16 %v85
    %v463 = vunpack.c.h.b16 %v85
    %v464 = vunpack.c.l.b16 %v86
    %v465 = vunpack.c.l.b16 %v87
    %v466 = vunpack.c.h.b16 %v87
    %v467 = vunpack.c.l.b16 %v88
    %v468 = vunpack.c.h.b16 %v88
    %v469 = vunpack.c.l.b16 %v89
    %v470 = vunpack.c.l.b16 %v90
    %v471 = vunpack.c.h.b16 %v90
    %v472 = vunpack.c.l.b16 %v91
    %v473 = vunpack.c.h.b16 %v91
    %v474 = vunpack.c.l.b16 %v92
    %v475 = vunpack.c.l.b16 %v93
    %v476 = vunpack.c.h.b16 %v93
    %v477 = vunpack.c.l.b16 %v94
    %v478 = vunpack.c.h.b16 %v94
    %v479 = vunpack.c.l.b16 %v95
    %v480 = vunpack.c.l.b16 %v96
    %v481 = vunpack.c.h.b16 %v96
    %v482 = vunpack.c.l.b16 %v97
    %v483 = vunpack.c.h.b16 %v97
    %v484 = vunpack.c.l.b16 %v98
    %v485 = vunpack.c.l.b16 %v99
    %v486 = vunpack.c.h.b16 %v99
    %v487 = vunpack.c.l.b16 %v100
    %v488 = vunpack.c.h.b16 %v100
    %v489 = vunpack.c.l.b16 %v101
    %v490 = vunpack.c.l.b16 %v102
    %v491 = vunpack.c.h.b16 %v102
    %v492 = vunpack.c.l.b16 %v103
    %v493 = vunpack.c.h.b16 %v103
    %v494 = vunpack.c.l.b16 %v104
    %v495 = vunpack.c.l.b16 %v105
    %v496 = vunpack.c.h.b16 %v105
    %v497 = vunpack.c.l.b16 %v106
    %v498 = vunpack.c.h.b16 %v106
    %v499 = vunpack.c.l.b16 %v107
    %v500 = vunpack.c.l.b16 %v108
    %v501 = vunpack.c.h.b16 %v108
    %v502 = vunpack.c.l.b16 %v109
    %v503 = vunpack.c.h.b16 %v109
    %v504 = vunpack.c.l.b16 %v110
    %v505 = vunpack.c.l.b16 %v111
    %v506 = vunpack.c.h.b16 %v111
    %v507 = vunpack.c.l.b16 %v112
    %v508 = vunpack.c.h.b16 %v112
    %v509 = vunpack.c.l.b16 %v113
    %v510 = vunpack.c.l.b16 %v114
    %v511 = vunpack.c.h.b16 %v114
    %v512 = vunpack.c.l.b16 %v115
    %v513 = vunpack.c.h.b16 %v115
    %v514 = vunpack.c.l.b16 %v116
    %v515 = vunpack.c.l.b16 %v117
    %v516 = vunpack.c.h.b16 %v117
    %v517 = vunpack.c.l.b16 %v118
    %v518 = vunpack.c.h.b16 %v118
    %v519 = vunpack.c.l.b16 %v119
    %v520 = vunpack.c.l.b16 %v120
    %v521 = vunpack.c.h.b16 %v120
    %v522 = vunpack.c.l.b16 %v121
    %v523 = vunpack.c.h.b16 %v121
    %v524 = vunpack.c.l.b16 %v122
    %v525 = vunpack.c.l.b16 %v123
    %v526 = vunpack.c.h.b16 %v123
    %v527 = vunpack.c.l.b16 %v124
    %v528 = vunpack.c.h.b16 %v124
    %v529 = vunpack.c.l.b16 %v125
    %v530 = vunpack.c.l.b16 %v126
    %v531 = vunpack.c.h.b16 %v126
    %v532 = vunpack.c.l.b16 %v127
    %v533 = vunpack.c.h.b16 %v127
    %v534 = vunpack.c.l.b16 %v128
    %v535 = vunpack.c.l.b16 %v129
    %v536 = vunpack.c.h.b16 %v129
    %v537 = vunpack.c.l.b16 %v130
    %v538 = vunpack.c.h.b16 %v130
    %v539 = vunpack.c.l.b16 %v131
    %v540 = vunpack.c.l.b16 %v132
    %v541 = vunpack.c.h.b16 %v132
    %v542 = vunpack.c.l.b16 %v133
    %v543 = vunpack.c.h.b16 %v133
    %v544 = vunpack.c.l.b16 %v134
    %v545 = vunpack.c.l.b16 %v135
    %v546 = vunpack.c.h.b16 %v135
    %v547 = vunpack.c.l.b16 %v136
    %v548 = vunpack.c.h.b16 %v136
    %v549 = vunpack.c.l.b16 %v137
    %v550 = vunpack.c.l.b16 %v138
    %v551 = vunpack.c.h.b16 %v138
    %v552 = vunpack.c.l.b16 %v139
    %v553 = vunpack.c.h.b16 %v139
    %v554 = vunpack.c.l.b16 %v140
    %v555 = vunpack.c.l.b16 %v141
    %v556 = vunpack.c.h.b16 %v141
    %v557 = vunpack.c.l.b16 %v142
    %v558 = vunpack.c.h.b16 %v142
    %v559 = vunpack.c.l.b16 %v143
    %v560 = vunpack.c.l.b16 %v144
    %v561 = vunpack.c.h.b16 %v144
    %v562 = vunpack.c.l.b16 %v145
    %v563 = vunpack.c.h.b16 %v145
    %v564 = vunpack.c.l.b16 %v146
    %v565 = vunpack.c.l.b16 %v147
    %v566 = vunpack.c.h.b16 %v147
    %v567 = vunpack.c.l.b16 %v148
    %v568 = vunpack.c.h.b16 %v148
    %v569 = vunpack.c.l.b16 %v149
    %v570 = vunpack.c.l.b16 %v150
    %v571 = vunpack.c.h.b16 %v150
    %v572 = vunpack.c.l.b16 %v151
    %v573 = vunpack.c.h.b16 %v151
    %v574 = vunpack.c.l.b16 %v152
    %v575 = vunpack.c.l.b16 %v153
    %v576 = vunpack.c.h.b16 %v153
    %v577 = vunpack.c.l.b16 %v154
    %v578 = vunpack.c.h.b16 %v154
    %v579 = vunpack.c.l.b16 %v155
    %v580 = vunpack.c.l.b16 %v156
    %v581 = vunpack.c.h.b16 %v156
    %v582 = vunpack.c.l.b16 %v157
    %v583 = vunpack.c.h.b16 %v157
    %v584 = vunpack.c.l.b16 %v158
    %v585 = vunpack.c.l.b16 %v159
    %v586 = vunpack.c.h.b16 %v159
    %v587 = vunpack.c.l.b16 %v160
    %v588 = vunpack.c.h.b16 %v160
    %v589 = vunpack.c.l.b16 %v161
    %v590 = vunpack.c.l.b16 %v162
    %v591 = vunpack.c.h.b16 %v162
    %v592 = vunpack.c.l.b16 %v163
    %v593 = vunpack.c.h.b16 %v163
    %v594 = vunpack.c.l.b16 %v164
    %v595 = vunpack.c.l.b16 %v165
    %v596 = vunpack.c.h.b16 %v165
    %v597 = vunpack.c.l.b16 %v166
    %v598 = vunpack.c.h.b16 %v166
    %v599 = vunpack.c.l.b16 %v167
    %v600 = vunpack.c.l.b16 %v168
    %v601 = vunpack.c.h.b16 %v168
    %v602 = vunpack.c.l.b16 %v169
    %v603 = vunpack.c.h.b16 %v169
    %v604 = vunpack.c.l.b16 %v170
    %v605 = vunpack.c.l.b16 %v171
    %v606 = vunpack.c.h.b16 %v171
    %v607 = vunpack.c.l.b16 %v172
    %v608 = vunpack.c.h.b16 %v172
    %v609 = vunpack.c.l.b16 %v173
    %v610 = vunpack.c.l.b16 %v174
    %v611 = vunpack.c.h.b16 %v174
    %v612 = vunpack.c.l.b16 %v175
    %v613 = vunpack.c.h.b16 %v175
    %v614 = vunpack.c.l.b16 %v176
    %v615 = vunpack.c.l.b16 %v177
    %v616 = vunpack.c.h.b16 %v177
    %v617 = vunpack.c.l.b16 %v178
    %v618 = vunpack.c.h.b16 %v178
    %v619 = vunpack.c.l.b16 %v179
    %v620 = vunpack.c.l.b16 %v180
    %v621 = vunpack.c.h.b16 %v180
    %v622 = vunpack.c.l.b16 %v181
    %v623 = vunpack.c.h.b16 %v181
    %v624 = vunpack.c.l.b16 %v182
    %v625 = vunpack.c.l.b16 %v183
    %v626 = vunpack.c.h.b16 %v183
    %v627 = vunpack.c.l.b16 %v184
    %v628 = vunpack.c.h.b16 %v184
    %v629 = vunpack.c.l.b16 %v185
    %v630 = vunpack.c.l.b16 %v186
    %v631 = vunpack.c.h.b16 %v186
    %v632 = vunpack.c.l.b16 %v187
    %v633 = vunpack.c.h.b16 %v187
    %v634 = vunpack.c.l.b16 %v188
    %v635 = vpack.c.b16 %v390, %v385
    %v636 = vpack.c.b16 %v391, %v386
    %v637 = vpack.c.b16 %v392, %v387
    %v638 = vpack.c.b16 %v393, %v388
    %v639 = vpack.c.b16 %v394, %v389
    %v640 = vpack.c.b16 %v400, %v395
    %v641 = vpack.c.b16 %v401, %v396
    %v642 = vpack.c.b16 %v402, %v397
    %v643 = vpack.c.b16 %v403, %v398
    %v644 = vpack.c.b16 %v404, %v399
    %v645 = vpack.c.b16 %v410, %v405
    %v646 = vpack.c.b16 %v411, %v406
    %v647 = vpack.c.b16 %v412, %v407
    %v648 = vpack.c.b16 %v413, %v408
    %v649 = vpack.c.b16 %v414, %v409
    %v650 = vpack.c.b16 %v420, %v415
    %v651 = vpack.c.b16 %v421, %v416
    %v652 = vpack.c.b16 %v422, %v417
    %v653 = vpack.c.b16 %v423, %v418
    %v654 = vpack.c.b16 %v424, %v419
    %v655 = vpack.c.b16 %v430, %v425
    %v656 = vpack.c.b16 %v431, %v426
    %v657 = vpack.c.b16 %v432, %v427
    %v658 = vpack.c.b16 %v433, %v428
    %v659 = vpack.c.b16 %v434, %v429
    %v660 = vpack.c.b16 %v440, %v435
    %v661 = vpack.c.b16 %v441, %v436
    %v662 = vpack.c.b16 %v442, %v437
    %v663 = vpack.c.b16 %v443, %v438
    %v664 = vpack.c.b16 %v444, %v439
    %v665 = vpack.c.b16 %v450, %v445
    %v666 = vpack.c.b16 %v451, %v446
    %v667 = vpack.c.b16 %v452, %v447
    %v668 = vpack.c.b16 %v453, %v448
    %v669 = vpack.c.b16 %v454, %v449
    %v670 = vpack.c.b16 %v460, %v455
    %v671 = vpack.c.b16 %v461, %v456
    %v672 = vpack.c.b16 %v462, %v457
    %v673 = vpack.c.b16 %v463, %v458
    %v674 = vpack.c.b16 %v464, %v459
    %v675 = vpack.c.b16 %v470, %v465
    %v676 = vpack.c.b16 %v471, %v466
    %v677 = vpack.c.b16 %v472, %v467
    %v678 = vpack.c.b16 %v473, %v468
    %v679 = vpack.c.b16 %v474, %v469
    %v680 = vpack.c.b16 %v480, %v475
    %v681 = vpack.c.b16 %v481, %v476
    %v682 = vpack.c.b16 %v482, %v477
    %v683 = vpack.c.b16 %v483, %v478
    %v684 = vpack.c.b16 %v484, %v479
    %v685 = vpack.c.b16 %v490, %v485
    %v686 = vpack.c.b16 %v491, %v486
    %v687 = vpack.c.b16 %v492, %v487
    %v688 = vpack.c.b16 %v493, %v488
    %v689 = vpack.c.b16 %v494, %v489
    %v690 = vpack.c.b16 %v500, %v495
    %v691 = vpack.c.b16 %v501, %v496
    %v692 = vpack.c.b16 %v502, %v497
    %v693 = vpack.c.b16 %v503, %v498
    %v694 = vpack.c.b16 %v504, %v499
    %v695 = vpack.c.b16 %v510, %v505
    %v696 = vpack.c.b16 %v511, %v506
    %v697 = vpack.c.b16 %v512, %v507
    %v698 = vpack.c.b16 %v513, %v508
    %v699 = vpack.c.b16 %v514, %v509
    %v700 = vpack.c.b16 %v520, %v515
    %v701 = vpack.c.b16 %v521, %v516
    %v702 = vpack.c.b16 %v522, %v517
    %v703 = vpack.c.b16 %v523, %v518
    %v704 = vpack.c.b16 %v524, %v519
    %v705 = vpack.c.b16 %v530, %v525
    %v706 = vpack.c.b16 %v531, %v526
    %v707 = vpack.c.b16 %v532, %v527
    %v708 = vpack.c.b16 %v533, %v528
    %v709 = vpack.c.b16 %v534, %v529
    %v710 = vpack.c.b16 %v540, %v535
    %v711 = vpack.c.b16 %v541, %v536
    %v712 = vpack.c.b16 %v542, %v537
    %v713 = vpack.c.b16 %v543, %v538
    %v714 = vpack.c.b16 %v544, %v539
    %v715 = vpack.c.b16 %v550, %v545
    %v716 = vpack.c.b16 %v551, %v546
    %v717 = vpack.c.b16 %v552, %v547
    %v718 = vpack.c.b16 %v553, %v548
    %v719 = vpack.c.b16 %v554, %v549
    %v720 = vpack.c.b16 %v560, %v555
    %v721 = vpack.c.b16 %v561, %v556
    %v722 = vpack.c.b16 %v562, %v557
    %v723 = vpack.c.b16 %v563, %v558
    %v724 = vpack.c.b16 %v564, %v559
    %v725 = vpack.c.b16 %v570, %v565
    %v726 = vpack.c.b16 %v571, %v566
    %v727 = vpack.c.b16 %v572, %v567
    %v728 = vpack.c.b16 %v573, %v568
    %v729 = vpack.c.b16 %v574, %v569
    %v730 = vpack.c.b16 %v580, %v575
    %v731 = vpack.c.b16 %v581, %v576
    %v732 = vpack.c.b16 %v582, %v577
    %v733 = vpack.c.b16 %v583, %v578
    %v734 = vpack.c.b16 %v584, %v579
    %v735 = vpack.c.b16 %v590, %v585
    %v736 = vpack.c.b16 %v591, %v586
    %v737 = vpack.c.b16 %v592, %v587
    %v738 = vpack.c.b16 %v593, %v588
    %v739 = vpack.c.b16 %v594, %v589
    %v740 = vpack.c.b16 %v600, %v595
    %v741 = vpack.c.b16 %v601, %v596
    %v742 = vpack.c.b16 %v602, %v597
    %v743 = vpack.c.b16 %v603, %v598
    %v744 = vpack.c.b16 %v604, %v599
    %v745 = vpack.c.b16 %v610, %v605
    %v746 = vpack.c.b16 %v611, %v606
    %v747 = vpack.c.b16 %v612, %v607
    %v748 = vpack.c.b16 %v613, %v608
    %v749 = vpack.c.b16 %v614, %v609
    %v750 = vpack.c.b16 %v620, %v615
    %v751 = vpack.c.b16 %v621, %v616
    %v752 = vpack.c.b16 %v622, %v617
    %v753 = vpack.c.b16 %v623, %v618
    %v754 = vpack.c.b16 %v624, %v619
    %v755 = vpack.c.b16 %v630, %v625
    %v756 = vpack.c.b16 %v631, %v626
    %v757 = vpack.c.b16 %v632, %v627
    %v758 = vpack.c.b16 %v633, %v628
    %v759 = vpack.c.b16 %v634, %v629
    %vm885 = vcmask 130048
    %v887 = vsel %vm885, %v231, 0
    %889 = vmatprep.subr.bf16.mxu0 %v636
    %890 = vmatpush1.bf16.msra.mxu0 %v635
    %891 = vmatprep.subr.bf16.mxu0 %v641
    %892 = vmatpush1.bf16.msra.mxu0 %v640
    %893 = vmatprep.subr.bf16.mxu0 %v646
    %894 = vmatpush1.bf16.msra.mxu0 %v645
    %895 = vmatprep.subr.bf16.mxu0 %v651
    %896 = vmatpush1.bf16.msra.mxu0 %v650
    %897 = vmatprep.subr.bf16.mxu0 %v656
    %898 = vmatpush1.bf16.msra.mxu0 %v655
    %899 = vmatprep.subr.bf16.mxu0 %v661
    %900 = vmatpush1.bf16.msra.mxu0 %v660
    %901 = vmatprep.subr.bf16.mxu0 %v666
    %902 = vmatpush1.bf16.msra.mxu0 %v665
    %903 = vmatprep.subr.bf16.mxu0 %v671
    %904 = vmatpush1.bf16.msra.mxu0 %v670
    %905 = vmatprep.subr.bf16.mxu0 %v676
    %906 = vmatpush1.bf16.msra.mxu0 %v675
    %907 = vmatprep.subr.bf16.mxu0 %v681
    %908 = vmatpush1.bf16.msra.mxu0 %v680
    %909 = vmatprep.subr.bf16.mxu0 %v686
    %910 = vmatpush1.bf16.msra.mxu0 %v685
    %911 = vmatprep.subr.bf16.mxu0 %v691
    %912 = vmatpush1.bf16.msra.mxu0 %v690
    %913 = vmatprep.subr.bf16.mxu0 %v696
    %914 = vmatpush1.bf16.msra.mxu0 %v695
    %915 = vmatprep.subr.bf16.mxu0 %v701
    %916 = vmatpush1.bf16.msra.mxu0 %v700
    %917 = vmatprep.subr.bf16.mxu0 %v706
    %918 = vmatpush1.bf16.msra.mxu0 %v705
    %919 = vmatprep.subr.bf16.mxu0 %v711
    %920 = vmatpush1.bf16.msra.mxu0 %v710
    %921 = vmatprep.mubr.bf16.mxu0 %v229
    %922 = vmatmul.mubr.bf16.gmra.mrb[0].mxu0 %v228
    %v923 = vpop.f32.mrb[0].mxu0
    %v924 = vadd.f32 %v194, %v923
    %v925 = vpop.f32.mrb[0].mxu0
    %v926 = vadd.f32 %v198, %v925
    %v927 = vpop.f32.mrb[0].mxu0
    %v928 = vadd.f32 %v194, %v927
    %v929 = vpop.f32.mrb[0].mxu0
    %v930 = vadd.f32 %v198, %v929
    %931 = vdwg.mxu0
    %932 = vmatprep.subr.bf16.mxu0 %v716
    %933 = vmatpush1.bf16.msra.mxu0 %v715
    %934 = vmatprep.subr.bf16.mxu0 %v721
    %935 = vmatpush1.bf16.msra.mxu0 %v720
    %936 = vmatprep.subr.bf16.mxu0 %v726
    %937 = vmatpush1.bf16.msra.mxu0 %v725
    %938 = vmatprep.subr.bf16.mxu0 %v731
    %939 = vmatpush1.bf16.msra.mxu0 %v730
    %940 = vmatprep.subr.bf16.mxu0 %v736
    %941 = vmatpush1.bf16.msra.mxu0 %v735
    %942 = vmatprep.subr.bf16.mxu0 %v741
    %943 = vmatpush1.bf16.msra.mxu0 %v740
    %944 = vmatprep.subr.bf16.mxu0 %v746
    %945 = vmatpush1.bf16.msra.mxu0 %v745
    %946 = vmatprep.subr.bf16.mxu0 %v751
    %947 = vmatpush1.bf16.msra.mxu0 %v750
    %948 = vmatprep.subr.bf16.mxu0 %v756
    %949 = vmatpush1.bf16.msra.mxu0 %v755
    %950 = vmatprep.subr.bf16.mxu0 0
    %951 = vmatpush1.bf16.msra.mxu0 0
    %952 = vmatprep.subr.bf16.mxu0 0
    %953 = vmatpush1.bf16.msra.mxu0 0
    %954 = vmatprep.subr.bf16.mxu0 0
    %955 = vmatpush1.bf16.msra.mxu0 0
    %956 = vmatprep.subr.bf16.mxu0 0
    %957 = vmatpush1.bf16.msra.mxu0 0
    %958 = vmatprep.subr.bf16.mxu0 0
    %959 = vmatpush1.bf16.msra.mxu0 0
    %960 = vmatprep.subr.bf16.mxu0 0
    %961 = vmatpush1.bf16.msra.mxu0 0
    %962 = vmatprep.subr.bf16.mxu0 0
    %963 = vmatpush1.bf16.msra.mxu0 0
    %964 = vmatprep.mubr.bf16.mxu0 %v887
    %965 = vmatmul.mubr.bf16.gmra.mrb[0].mxu0 %v230
    %v966 = vpop.f32.mrb[0].mxu0
    %v967 = vadd.f32 %v924, %v966
    %v968 = vpop.f32.mrb[0].mxu0
    %v969 = vadd.f32 %v926, %v968
    %v970 = vpop.f32.mrb[0].mxu0
    %v971 = vadd.f32 %v928, %v970
    %v972 = vpop.f32.mrb[0].mxu0
    %v973 = vadd.f32 %v930, %v972
    %974 = vdwg.mxu0
    %975 = vmatprep.subr.bf16.mxu0 %v638
    %976 = vmatpush1.bf16.msra.mxu0 %v637
    %977 = vmatprep.subr.bf16.mxu0 %v643
    %978 = vmatpush1.bf16.msra.mxu0 %v642
    %979 = vmatprep.subr.bf16.mxu0 %v648
    %980 = vmatpush1.bf16.msra.mxu0 %v647
    %981 = vmatprep.subr.bf16.mxu0 %v653
    %982 = vmatpush1.bf16.msra.mxu0 %v652
    %983 = vmatprep.subr.bf16.mxu0 %v658
    %984 = vmatpush1.bf16.msra.mxu0 %v657
    %985 = vmatprep.subr.bf16.mxu0 %v663
    %986 = vmatpush1.bf16.msra.mxu0 %v662
    %987 = vmatprep.subr.bf16.mxu0 %v668
    %988 = vmatpush1.bf16.msra.mxu0 %v667
    %989 = vmatprep.subr.bf16.mxu0 %v673
    %990 = vmatpush1.bf16.msra.mxu0 %v672
    %991 = vmatprep.subr.bf16.mxu0 %v678
    %992 = vmatpush1.bf16.msra.mxu0 %v677
    %993 = vmatprep.subr.bf16.mxu0 %v683
    %994 = vmatpush1.bf16.msra.mxu0 %v682
    %995 = vmatprep.subr.bf16.mxu0 %v688
    %996 = vmatpush1.bf16.msra.mxu0 %v687
    %997 = vmatprep.subr.bf16.mxu0 %v693
    %998 = vmatpush1.bf16.msra.mxu0 %v692
    %999 = vmatprep.subr.bf16.mxu0 %v698
    %1000 = vmatpush1.bf16.msra.mxu0 %v697
    %1001 = vmatprep.subr.bf16.mxu0 %v703
    %1002 = vmatpush1.bf16.msra.mxu0 %v702
    %1003 = vmatprep.subr.bf16.mxu0 %v708
    %1004 = vmatpush1.bf16.msra.mxu0 %v707
    %1005 = vmatprep.subr.bf16.mxu0 %v713
    %1006 = vmatpush1.bf16.msra.mxu0 %v712
    %1007 = vmatprep.mubr.bf16.mxu0 %v229
    %1008 = vmatmul.mubr.bf16.gmra.mrb[0].mxu0 %v228
    %v1009 = vpop.f32.mrb[0].mxu0
    %v1010 = vadd.f32 %v202, %v1009
    %v1011 = vpop.f32.mrb[0].mxu0
    %v1012 = vadd.f32 %v206, %v1011
    %v1013 = vpop.f32.mrb[0].mxu0
    %v1014 = vadd.f32 %v202, %v1013
    %v1015 = vpop.f32.mrb[0].mxu0
    %v1016 = vadd.f32 %v206, %v1015
    %1017 = vdwg.mxu0
    %1018 = vmatprep.subr.bf16.mxu0 %v718
    %1019 = vmatpush1.bf16.msra.mxu0 %v717
    %1020 = vmatprep.subr.bf16.mxu0 %v723
    %1021 = vmatpush1.bf16.msra.mxu0 %v722
    %1022 = vmatprep.subr.bf16.mxu0 %v728
    %1023 = vmatpush1.bf16.msra.mxu0 %v727
    %1024 = vmatprep.subr.bf16.mxu0 %v733
    %1025 = vmatpush1.bf16.msra.mxu0 %v732
    %1026 = vmatprep.subr.bf16.mxu0 %v738
    %1027 = vmatpush1.bf16.msra.mxu0 %v737
    %1028 = vmatprep.subr.bf16.mxu0 %v743
    %1029 = vmatpush1.bf16.msra.mxu0 %v742
    %1030 = vmatprep.subr.bf16.mxu0 %v748
    %1031 = vmatpush1.bf16.msra.mxu0 %v747
    %1032 = vmatprep.subr.bf16.mxu0 %v753
    %1033 = vmatpush1.bf16.msra.mxu0 %v752
    %1034 = vmatprep.subr.bf16.mxu0 %v758
    %1035 = vmatpush1.bf16.msra.mxu0 %v757
    %1036 = vmatprep.subr.bf16.mxu0 0
    %1037 = vmatpush1.bf16.msra.mxu0 0
    %1038 = vmatprep.subr.bf16.mxu0 0
    %1039 = vmatpush1.bf16.msra.mxu0 0
    %1040 = vmatprep.subr.bf16.mxu0 0
    %1041 = vmatpush1.bf16.msra.mxu0 0
    %1042 = vmatprep.subr.bf16.mxu0 0
    %1043 = vmatpush1.bf16.msra.mxu0 0
    %1044 = vmatprep.subr.bf16.mxu0 0
    %1045 = vmatpush1.bf16.msra.mxu0 0
    %1046 = vmatprep.subr.bf16.mxu0 0
    %1047 = vmatpush1.bf16.msra.mxu0 0
    %1048 = vmatprep.subr.bf16.mxu0 0
    %1049 = vmatpush1.bf16.msra.mxu0 0
    %1050 = vmatprep.mubr.bf16.mxu0 %v887
    %1051 = vmatmul.mubr.bf16.gmra.mrb[0].mxu0 %v230
    %v1052 = vpop.f32.mrb[0].mxu0
    %v1053 = vadd.f32 %v1010, %v1052
    %v1054 = vpop.f32.mrb[0].mxu0
    %v1055 = vadd.f32 %v1012, %v1054
    %v1056 = vpop.f32.mrb[0].mxu0
    %v1057 = vadd.f32 %v1014, %v1056
    %v1058 = vpop.f32.mrb[0].mxu0
    %v1059 = vadd.f32 %v1016, %v1058
    %1060 = vdwg.mxu0
    %1061 = vmatprep.subr.bf16.mxu0 0
    %1062 = vmatpush1.bf16.msra.mxu0 %v639
    %1063 = vmatprep.subr.bf16.mxu0 0
    %1064 = vmatpush1.bf16.msra.mxu0 %v644
    %1065 = vmatprep.subr.bf16.mxu0 0
    %1066 = vmatpush1.bf16.msra.mxu0 %v649
    %1067 = vmatprep.subr.bf16.mxu0 0
    %1068 = vmatpush1.bf16.msra.mxu0 %v654
    %1069 = vmatprep.subr.bf16.mxu0 0
    %1070 = vmatpush1.bf16.msra.mxu0 %v659
    %1071 = vmatprep.subr.bf16.mxu0 0
    %1072 = vmatpush1.bf16.msra.mxu0 %v664
    %1073 = vmatprep.subr.bf16.mxu0 0
    %1074 = vmatpush1.bf16.msra.mxu0 %v669
    %1075 = vmatprep.subr.bf16.mxu0 0
    %1076 = vmatpush1.bf16.msra.mxu0 %v674
    %1077 = vmatprep.subr.bf16.mxu0 0
    %1078 = vmatpush1.bf16.msra.mxu0 %v679
    %1079 = vmatprep.subr.bf16.mxu0 0
    %1080 = vmatpush1.bf16.msra.mxu0 %v684
    %1081 = vmatprep.subr.bf16.mxu0 0
    %1082 = vmatpush1.bf16.msra.mxu0 %v689
    %1083 = vmatprep.subr.bf16.mxu0 0
    %1084 = vmatpush1.bf16.msra.mxu0 %v694
    %1085 = vmatprep.subr.bf16.mxu0 0
    %1086 = vmatpush1.bf16.msra.mxu0 %v699
    %1087 = vmatprep.subr.bf16.mxu0 0
    %1088 = vmatpush1.bf16.msra.mxu0 %v704
    %1089 = vmatprep.subr.bf16.mxu0 0
    %1090 = vmatpush1.bf16.msra.mxu0 %v709
    %1091 = vmatprep.subr.bf16.mxu0 0
    %1092 = vmatpush1.bf16.msra.mxu0 %v714
    %1093 = vmatprep.mubr.bf16.mxu0 %v229
    %1094 = vmatmul.mubr.bf16.gmra.mrb[0].mxu0 %v228
    %v1095 = vpop.f32.mrb[0].mxu0
    %v1096 = vadd.f32 %v210, %v1095
    %v1097 = vpop.f32.mrb[0].mxu0
    %v1098 = vpop.f32.mrb[0].mxu0
    %v1099 = vadd.f32 %v210, %v1098
    %v1100 = vpop.f32.mrb[0].mxu0
    %1101 = vdwg.mxu0
    %1102 = vmatprep.subr.bf16.mxu0 0
    %1103 = vmatpush1.bf16.msra.mxu0 %v719
    %1104 = vmatprep.subr.bf16.mxu0 0
    %1105 = vmatpush1.bf16.msra.mxu0 %v724
    %1106 = vmatprep.subr.bf16.mxu0 0
    %1107 = vmatpush1.bf16.msra.mxu0 %v729
    %1108 = vmatprep.subr.bf16.mxu0 0
    %1109 = vmatpush1.bf16.msra.mxu0 %v734
    %1110 = vmatprep.subr.bf16.mxu0 0
    %1111 = vmatpush1.bf16.msra.mxu0 %v739
    %1112 = vmatprep.subr.bf16.mxu0 0
    %1113 = vmatpush1.bf16.msra.mxu0 %v744
    %1114 = vmatprep.subr.bf16.mxu0 0
    %1115 = vmatpush1.bf16.msra.mxu0 %v749
    %1116 = vmatprep.subr.bf16.mxu0 0
    %1117 = vmatpush1.bf16.msra.mxu0 %v754
    %1118 = vmatprep.subr.bf16.mxu0 0
    %1119 = vmatpush1.bf16.msra.mxu0 %v759
    %1120 = vmatprep.subr.bf16.mxu0 0
    %1121 = vmatpush1.bf16.msra.mxu0 0
    %1122 = vmatprep.subr.bf16.mxu0 0
    %1123 = vmatpush1.bf16.msra.mxu0 0
    %1124 = vmatprep.subr.bf16.mxu0 0
    %1125 = vmatpush1.bf16.msra.mxu0 0
    %1126 = vmatprep.subr.bf16.mxu0 0
    %1127 = vmatpush1.bf16.msra.mxu0 0
    %1128 = vmatprep.subr.bf16.mxu0 0
    %1129 = vmatpush1.bf16.msra.mxu0 0
    %1130 = vmatprep.subr.bf16.mxu0 0
    %1131 = vmatpush1.bf16.msra.mxu0 0
    %1132 = vmatprep.subr.bf16.mxu0 0
    %1133 = vmatpush1.bf16.msra.mxu0 0
    %1134 = vmatprep.mubr.bf16.mxu0 %v887
    %1135 = vmatmul.mubr.bf16.gmra.mrb[0].mxu0 %v230
    %v1136 = vpop.f32.mrb[0].mxu0
    %v1137 = vadd.f32 %v1096, %v1136
    %v1138 = vpop.f32.mrb[0].mxu0
    %v1139 = vpop.f32.mrb[0].mxu0
    %v1140 = vadd.f32 %v1099, %v1139
    %v1141 = vpop.f32.mrb[0].mxu0
    %1142 = vdwg.mxu0
    %v1143 = vmax.f32 %v967, 0.0
    %v1144 = vmax.f32 %v969, 0.0
    %v1145 = vmax.f32 %v1053, 0.0
    %v1146 = vmax.f32 %v1055, 0.0
    %v1147 = vmax.f32 %v1137, 0.0
    %v1148 = vmax.f32 %v971, 0.0
    %v1149 = vmax.f32 %v973, 0.0
    %v1150 = vmax.f32 %v1057, 0.0
    %v1151 = vmax.f32 %v1059, 0.0
    %v1152 = vmax.f32 %v1140, 0.0
    %v1153 = vpack.c.bf16 %v1148, %v1143
    %v1154 = vpack.c.bf16 %v1149, %v1144
    %v1155 = vpack.c.bf16 %v1150, %v1145
    %v1156 = vpack.c.bf16 %v1151, %v1146
    %v1157 = vpack.c.bf16 %v1152, %v1147
    %v1158 = vld [vmem:[%s3] sm:$0xf]
    %v1159 = vld [vmem:[%s3 + $0x4] sm:$0xf]
    %v1160 = vld [vmem:[%s3 + $0x8] sm:$0xf]
    %v1161 = vld [vmem:[%s3 + $0xc] sm:$0xf]
    %v1162 = vld [vmem:[%s3 + $0x10] sm:$0xf]
    %v1163 = vld [vmem:[%s3 + $0x14] sm:$0xf]
    %v1164 = vld [vmem:[%s3 + $0x18] sm:$0xf]
    %v1165 = vld [vmem:[%s3 + $0x1c] sm:$0xf]
    %v1166 = vld [vmem:[%s3 + $0x20] sm:$0xf]
    %v1167 = vld [vmem:[%s3 + $0x24] sm:$0xf]
    %v1168 = vld [vmem:[%s3 + $0x28] sm:$0xf]
    %v1169 = vld [vmem:[%s3 + $0x2c] sm:$0xf]
    %v1170 = vld [vmem:[%s3 + $0x30] sm:$0xf]
    %v1171 = vld [vmem:[%s3 + $0x34] sm:$0xf]
    %v1172 = vld [vmem:[%s3 + $0x38] sm:$0xf]
    %v1173 = vld [vmem:[%s3 + $0x3c] sm:$0xf]
    %v1174 = vld [vmem:[%s3 + $0x40] sm:$0xf]
    %v1175 = vld [vmem:[%s3 + $0x44] sm:$0xf]
    %v1176 = vld [vmem:[%s3 + $0x48] sm:$0xf]
    %v1177 = vld [vmem:[%s3 + $0x4c] sm:$0xf]
    %v1178 = vld [vmem:[%s3 + $0x50] sm:$0xf]
    %v1179 = vld [vmem:[%s3 + $0x54] sm:$0xf]
    %v1180 = vld [vmem:[%s3 + $0x58] sm:$0xf]
    %v1181 = vld [vmem:[%s3 + $0x5c] sm:$0xf]
    %v1182 = vld [vmem:[%s3 + $0x60] sm:$0xf]
    %v1183 = vld [vmem:[%s3 + $0x64] sm:$0xf]
    %v1184 = vld [vmem:[%s3 + $0x68] sm:$0xf]
    %v1185 = vld [vmem:[%s3 + $0x6c] sm:$0xf]
    %v1186 = vld [vmem:[%s3 + $0x70] sm:$0xf]
    %v1187 = vld [vmem:[%s3 + $0x74] sm:$0xf]
    %v1188 = vld [vmem:[%s3 + $0x78] sm:$0xf]
    %v1189 = vld [vmem:[%s3 + $0x7c] sm:$0xf]
    %v1190 = vld [vmem:[%s3 + $0x80] sm:$0xf]
    %v1191 = vld [vmem:[%s3 + $0x84] sm:$0xf]
    %v1192 = vld [vmem:[%s3 + $0x88] sm:$0xf]
    %v1193 = vld [vmem:[%s3 + $0x8c] sm:$0xf]
    %v1194 = vld [vmem:[%s3 + $0x90] sm:$0xf]
    %v1195 = vld [vmem:[%s3 + $0x94] sm:$0xf]
    %v1196 = vld [vmem:[%s3 + $0x98] sm:$0xf]
    %v1197 = vld [vmem:[%s3 + $0x9c] sm:$0xf]
    %v1198 = vld [vmem:[%s3 + $0xa0] sm:$0xf]
    %v1199 = vld [vmem:[%s3 + $0xa4] sm:$0xf]
    %v1200 = vld [vmem:[%s3 + $0xa8] sm:$0xf]
    %v1201 = vld [vmem:[%s3 + $0xac] sm:$0xf]
    %v1202 = vld [vmem:[%s3 + $0xb0] sm:$0xf]
    %v1203 = vld [vmem:[%s3 + $0xb4] sm:$0xf]
    %v1204 = vld [vmem:[%s3 + $0xb8] sm:$0xf]
    %v1205 = vld [vmem:[%s3 + $0xbc] sm:$0xf]
    %v1206 = vld [vmem:[%s3 + $0xc0] sm:$0xf]
    %v1207 = vld [vmem:[%s3 + $0xc4] sm:$0xf]
    %v1208 = vld [vmem:[%s3 + $0xc8] sm:$0xf]
    %v1209 = vld [vmem:[%s3 + $0xcc] sm:$0xf]
    %v1210 = vld [vmem:[%s3 + $0xd0] sm:$0xf]
    %v1211 = vld [vmem:[%s3 + $0xd4] sm:$0xf]
    %v1212 = vld [vmem:[%s3 + $0xd8] sm:$0xf]
    %v1213 = vld [vmem:[%s3 + $0xdc] sm:$0xf]
    %v1214 = vld [vmem:[%s3 + $0xe0] sm:$0xf]
    %v1215 = vld [vmem:[%s3 + $0xe4] sm:$0xf]
    %v1216 = vld [vmem:[%s3 + $0xe8] sm:$0xf]
    %v1217 = vld [vmem:[%s3 + $0xec] sm:$0xf]
    %v1218 = vld [vmem:[%s3 + $0xf0] sm:$0xf]
    %v1219 = vld [vmem:[%s3 + $0xf4] sm:$0xf]
    %v1220 = vld [vmem:[%s3 + $0xf8] sm:$0xf]
    %v1221 = vld [vmem:[%s3 + $0xfc] sm:$0xf]
    %v1222 = vld [vmem:[%s3 + $0x100] sm:$0xf]
    %v1223 = vld [vmem:[%s3 + $0x104] sm:$0xf]
    %v1224 = vld [vmem:[%s3 + $0x108] sm:$0xf]
    %v1225 = vld [vmem:[%s3 + $0x10c] sm:$0xf]
    %v1226 = vld [vmem:[%s3 + $0x110] sm:$0xf]
    %v1227 = vld [vmem:[%s3 + $0x114] sm:$0xf]
    %v1228 = vld [vmem:[%s3 + $0x118] sm:$0xf]
    %v1229 = vld [vmem:[%s3 + $0x11c] sm:$0xf]
    %v1230 = vld [vmem:[%s3 + $0x120] sm:$0xf]
    %v1231 = vld [vmem:[%s3 + $0x124] sm:$0xf]
    %v1232 = vld [vmem:[%s3 + $0x128] sm:$0xf]
    %v1233 = vld [vmem:[%s3 + $0x12c] sm:$0xf]
    %v1234 = vld [vmem:[%s3 + $0x130] sm:$0xf]
    %v1235 = vld [vmem:[%s3 + $0x134] sm:$0xf]
    %v1236 = vld [vmem:[%s3 + $0x138] sm:$0xf]
    %v1237 = vld [vmem:[%s3 + $0x13c] sm:$0xf]
    %v1238 = vld [vmem:[%s4] sm:$0x1]
    %v1240 = vlaneseq
    %v1241 = vshrl.u32 %v1240, 7
    %v1242 = vsub.s32 0, %v1241
    %v1243 = vrot.slane %v1238, %v1242
    %v1325 = vunpack.c.l.b16 %v1158
    %v1326 = vunpack.c.l.b16 %v1159
    %v1327 = vunpack.c.l.b16 %v1160
    %v1328 = vunpack.c.l.b16 %v1161
    %v1329 = vunpack.c.l.b16 %v1162
    %v1330 = vunpack.c.l.b16 %v1163
    %v1331 = vunpack.c.l.b16 %v1164
    %v1332 = vunpack.c.l.b16 %v1165
    %v1333 = vunpack.c.l.b16 %v1166
    %v1334 = vunpack.c.l.b16 %v1167
    %v1335 = vunpack.c.l.b16 %v1168
    %v1336 = vunpack.c.l.b16 %v1169
    %v1337 = vunpack.c.l.b16 %v1170
    %v1338 = vunpack.c.l.b16 %v1171
    %v1339 = vunpack.c.l.b16 %v1172
    %v1340 = vunpack.c.l.b16 %v1173
    %v1341 = vunpack.c.l.b16 %v1174
    %v1342 = vunpack.c.l.b16 %v1175
    %v1343 = vunpack.c.l.b16 %v1176
    %v1344 = vunpack.c.l.b16 %v1177
    %v1345 = vunpack.c.l.b16 %v1178
    %v1346 = vunpack.c.l.b16 %v1179
    %v1347 = vunpack.c.l.b16 %v1180
    %v1348 = vunpack.c.l.b16 %v1181
    %v1349 = vunpack.c.l.b16 %v1182
    %v1350 = vunpack.c.l.b16 %v1183
    %v1351 = vunpack.c.l.b16 %v1184
    %v1352 = vunpack.c.l.b16 %v1185
    %v1353 = vunpack.c.l.b16 %v1186
    %v1354 = vunpack.c.l.b16 %v1187
    %v1355 = vunpack.c.l.b16 %v1188
    %v1356 = vunpack.c.l.b16 %v1189
    %v1357 = vunpack.c.l.b16 %v1190
    %v1358 = vunpack.c.l.b16 %v1191
    %v1359 = vunpack.c.l.b16 %v1192
    %v1360 = vunpack.c.l.b16 %v1193
    %v1361 = vunpack.c.l.b16 %v1194
    %v1362 = vunpack.c.l.b16 %v1195
    %v1363 = vunpack.c.l.b16 %v1196
    %v1364 = vunpack.c.l.b16 %v1197
    %v1365 = vunpack.c.l.b16 %v1198
    %v1366 = vunpack.c.l.b16 %v1199
    %v1367 = vunpack.c.l.b16 %v1200
    %v1368 = vunpack.c.l.b16 %v1201
    %v1369 = vunpack.c.l.b16 %v1202
    %v1370 = vunpack.c.l.b16 %v1203
    %v1371 = vunpack.c.l.b16 %v1204
    %v1372 = vunpack.c.l.b16 %v1205
    %v1373 = vunpack.c.l.b16 %v1206
    %v1374 = vunpack.c.l.b16 %v1207
    %v1375 = vunpack.c.l.b16 %v1208
    %v1376 = vunpack.c.l.b16 %v1209
    %v1377 = vunpack.c.l.b16 %v1210
    %v1378 = vunpack.c.l.b16 %v1211
    %v1379 = vunpack.c.l.b16 %v1212
    %v1380 = vunpack.c.l.b16 %v1213
    %v1381 = vunpack.c.l.b16 %v1214
    %v1382 = vunpack.c.l.b16 %v1215
    %v1383 = vunpack.c.l.b16 %v1216
    %v1384 = vunpack.c.l.b16 %v1217
    %v1385 = vunpack.c.l.b16 %v1218
    %v1386 = vunpack.c.l.b16 %v1219
    %v1387 = vunpack.c.l.b16 %v1220
    %v1388 = vunpack.c.l.b16 %v1221
    %v1389 = vunpack.c.l.b16 %v1222
    %v1390 = vunpack.c.l.b16 %v1223
    %v1391 = vunpack.c.l.b16 %v1224
    %v1392 = vunpack.c.l.b16 %v1225
    %v1393 = vunpack.c.l.b16 %v1226
    %v1394 = vunpack.c.l.b16 %v1227
    %v1395 = vunpack.c.l.b16 %v1228
    %v1396 = vunpack.c.l.b16 %v1229
    %v1397 = vunpack.c.l.b16 %v1230
    %v1398 = vunpack.c.l.b16 %v1231
    %v1399 = vunpack.c.l.b16 %v1232
    %v1400 = vunpack.c.l.b16 %v1233
    %v1401 = vunpack.c.l.b16 %v1234
    %v1402 = vunpack.c.l.b16 %v1235
    %v1403 = vunpack.c.l.b16 %v1236
    %v1404 = vunpack.c.l.b16 %v1237
    %v1405 = vpack.c.b16 %v1326, %v1325
    %v1406 = vpack.c.b16 %v1328, %v1327
    %v1407 = vpack.c.b16 %v1330, %v1329
    %v1408 = vpack.c.b16 %v1332, %v1331
    %v1409 = vpack.c.b16 %v1334, %v1333
    %v1410 = vpack.c.b16 %v1336, %v1335
    %v1411 = vpack.c.b16 %v1338, %v1337
    %v1412 = vpack.c.b16 %v1340, %v1339
    %v1413 = vpack.c.b16 %v1342, %v1341
    %v1414 = vpack.c.b16 %v1344, %v1343
    %v1415 = vpack.c.b16 %v1346, %v1345
    %v1416 = vpack.c.b16 %v1348, %v1347
    %v1417 = vpack.c.b16 %v1350, %v1349
    %v1418 = vpack.c.b16 %v1352, %v1351
    %v1419 = vpack.c.b16 %v1354, %v1353
    %v1420 = vpack.c.b16 %v1356, %v1355
    %v1421 = vpack.c.b16 %v1358, %v1357
    %v1422 = vpack.c.b16 %v1360, %v1359
    %v1423 = vpack.c.b16 %v1362, %v1361
    %v1424 = vpack.c.b16 %v1364, %v1363
    %v1425 = vpack.c.b16 %v1366, %v1365
    %v1426 = vpack.c.b16 %v1368, %v1367
    %v1427 = vpack.c.b16 %v1370, %v1369
    %v1428 = vpack.c.b16 %v1372, %v1371
    %v1429 = vpack.c.b16 %v1374, %v1373
    %v1430 = vpack.c.b16 %v1376, %v1375
    %v1431 = vpack.c.b16 %v1378, %v1377
    %v1432 = vpack.c.b16 %v1380, %v1379
    %v1433 = vpack.c.b16 %v1382, %v1381
    %v1434 = vpack.c.b16 %v1384, %v1383
    %v1435 = vpack.c.b16 %v1386, %v1385
    %v1436 = vpack.c.b16 %v1388, %v1387
    %v1437 = vpack.c.b16 %v1390, %v1389
    %v1438 = vpack.c.b16 %v1392, %v1391
    %v1439 = vpack.c.b16 %v1394, %v1393
    %v1440 = vpack.c.b16 %v1396, %v1395
    %v1441 = vpack.c.b16 %v1398, %v1397
    %v1442 = vpack.c.b16 %v1400, %v1399
    %v1443 = vpack.c.b16 %v1402, %v1401
    %v1444 = vpack.c.b16 %v1404, %v1403
    %1485 = vmatprep.subr.bf16.mxu0 0
    %1486 = vmatpush1.bf16.msra.mxu0 %v1405
    %1487 = vmatprep.subr.bf16.mxu0 0
    %1488 = vmatpush1.bf16.msra.mxu0 %v1406
    %1489 = vmatprep.subr.bf16.mxu0 0
    %1490 = vmatpush1.bf16.msra.mxu0 %v1407
    %1491 = vmatprep.subr.bf16.mxu0 0
    %1492 = vmatpush1.bf16.msra.mxu0 %v1408
    %1493 = vmatprep.subr.bf16.mxu0 0
    %1494 = vmatpush1.bf16.msra.mxu0 %v1409
    %1495 = vmatprep.subr.bf16.mxu0 0
    %1496 = vmatpush1.bf16.msra.mxu0 %v1410
    %1497 = vmatprep.subr.bf16.mxu0 0
    %1498 = vmatpush1.bf16.msra.mxu0 %v1411
    %1499 = vmatprep.subr.bf16.mxu0 0
    %1500 = vmatpush1.bf16.msra.mxu0 %v1412
    %1501 = vmatprep.subr.bf16.mxu0 0
    %1502 = vmatpush1.bf16.msra.mxu0 %v1413
    %1503 = vmatprep.subr.bf16.mxu0 0
    %1504 = vmatpush1.bf16.msra.mxu0 %v1414
    %1505 = vmatprep.subr.bf16.mxu0 0
    %1506 = vmatpush1.bf16.msra.mxu0 %v1415
    %1507 = vmatprep.subr.bf16.mxu0 0
    %1508 = vmatpush1.bf16.msra.mxu0 %v1416
    %1509 = vmatprep.subr.bf16.mxu0 0
    %1510 = vmatpush1.bf16.msra.mxu0 %v1417
    %1511 = vmatprep.subr.bf16.mxu0 0
    %1512 = vmatpush1.bf16.msra.mxu0 %v1418
    %1513 = vmatprep.subr.bf16.mxu0 0
    %1514 = vmatpush1.bf16.msra.mxu0 %v1419
    %1515 = vmatprep.subr.bf16.mxu0 0
    %1516 = vmatpush1.bf16.msra.mxu0 %v1420
    %1517 = vmatprep.mubr.bf16.mxu0 %v1154
    %1518 = vmatmul.mubr.bf16.gmra.mrb[0].mxu0 %v1153
    %v1519 = vpop.f32.mrb[0].mxu0
    %v1520 = vadd.f32 %v1243, %v1519
    %v1521 = vpop.f32.mrb[0].mxu0
    %v1522 = vpop.f32.mrb[0].mxu0
    %v1523 = vadd.f32 %v1243, %v1522
    %v1524 = vpop.f32.mrb[0].mxu0
    %1525 = vdwg.mxu0
    %1526 = vmatprep.subr.bf16.mxu0 0
    %1527 = vmatpush1.bf16.msra.mxu0 %v1421
    %1528 = vmatprep.subr.bf16.mxu0 0
    %1529 = vmatpush1.bf16.msra.mxu0 %v1422
    %1530 = vmatprep.subr.bf16.mxu0 0
    %1531 = vmatpush1.bf16.msra.mxu0 %v1423
    %1532 = vmatprep.subr.bf16.mxu0 0
    %1533 = vmatpush1.bf16.msra.mxu0 %v1424
    %1534 = vmatprep.subr.bf16.mxu0 0
    %1535 = vmatpush1.bf16.msra.mxu0 %v1425
    %1536 = vmatprep.subr.bf16.mxu0 0
    %1537 = vmatpush1.bf16.msra.mxu0 %v1426
    %1538 = vmatprep.subr.bf16.mxu0 0
    %1539 = vmatpush1.bf16.msra.mxu0 %v1427
    %1540 = vmatprep.subr.bf16.mxu0 0
    %1541 = vmatpush1.bf16.msra.mxu0 %v1428
    %1542 = vmatprep.subr.bf16.mxu0 0
    %1543 = vmatpush1.bf16.msra.mxu0 %v1429
    %1544 = vmatprep.subr.bf16.mxu0 0
    %1545 = vmatpush1.bf16.msra.mxu0 %v1430
    %1546 = vmatprep.subr.bf16.mxu0 0
    %1547 = vmatpush1.bf16.msra.mxu0 %v1431
    %1548 = vmatprep.subr.bf16.mxu0 0
    %1549 = vmatpush1.bf16.msra.mxu0 %v1432
    %1550 = vmatprep.subr.bf16.mxu0 0
    %1551 = vmatpush1.bf16.msra.mxu0 %v1433
    %1552 = vmatprep.subr.bf16.mxu0 0
    %1553 = vmatpush1.bf16.msra.mxu0 %v1434
    %1554 = vmatprep.subr.bf16.mxu0 0
    %1555 = vmatpush1.bf16.msra.mxu0 %v1435
    %1556 = vmatprep.subr.bf16.mxu0 0
    %1557 = vmatpush1.bf16.msra.mxu0 %v1436
    %1558 = vmatprep.mubr.bf16.mxu0 %v1156
    %1559 = vmatmul.mubr.bf16.gmra.mrb[0].mxu0 %v1155
    %v1560 = vpop.f32.mrb[0].mxu0
    %v1561 = vadd.f32 %v1520, %v1560
    %v1562 = vpop.f32.mrb[0].mxu0
    %v1563 = vpop.f32.mrb[0].mxu0
    %v1564 = vadd.f32 %v1523, %v1563
    %v1565 = vpop.f32.mrb[0].mxu0
    %1566 = vdwg.mxu0
    %1567 = vmatprep.subr.bf16.mxu0 0
    %1568 = vmatpush1.bf16.msra.mxu0 %v1437
    %1569 = vmatprep.subr.bf16.mxu0 0
    %1570 = vmatpush1.bf16.msra.mxu0 %v1438
    %1571 = vmatprep.subr.bf16.mxu0 0
    %1572 = vmatpush1.bf16.msra.mxu0 %v1439
    %1573 = vmatprep.subr.bf16.mxu0 0
    %1574 = vmatpush1.bf16.msra.mxu0 %v1440
    %1575 = vmatprep.subr.bf16.mxu0 0
    %1576 = vmatpush1.bf16.msra.mxu0 %v1441
    %1577 = vmatprep.subr.bf16.mxu0 0
    %1578 = vmatpush1.bf16.msra.mxu0 %v1442
    %1579 = vmatprep.subr.bf16.mxu0 0
    %1580 = vmatpush1.bf16.msra.mxu0 %v1443
    %1581 = vmatprep.subr.bf16.mxu0 0
    %1582 = vmatpush1.bf16.msra.mxu0 %v1444
    %1583 = vmatprep.subr.bf16.mxu0 0
    %1584 = vmatpush1.bf16.msra.mxu0 0
    %1585 = vmatprep.subr.bf16.mxu0 0
    %1586 = vmatpush1.bf16.msra.mxu0 0
    %1587 = vmatprep.subr.bf16.mxu0 0
    %1588 = vmatpush1.bf16.msra.mxu0 0
    %1589 = vmatprep.subr.bf16.mxu0 0
    %1590 = vmatpush1.bf16.msra.mxu0 0
    %1591 = vmatprep.subr.bf16.mxu0 0
    %1592 = vmatpush1.bf16.msra.mxu0 0
    %1593 = vmatprep.subr.bf16.mxu0 0
    %1594 = vmatpush1.bf16.msra.mxu0 0
    %1595 = vmatprep.subr.bf16.mxu0 0
    %1596 = vmatpush1.bf16.msra.mxu0 0
    %1597 = vmatprep.subr.bf16.mxu0 0
    %1598 = vmatpush1.bf16.msra.mxu0 0
    %1599 = vmatprep.mubr.bf16.mxu0 0
    %1600 = vmatmul.mubr.bf16.gmra.mrb[0].mxu0 %v1157
    %v1601 = vpop.f32.mrb[0].mxu0
    %v1602 = vadd.f32 %v1561, %v1601
    %v1603 = vpop.f32.mrb[0].mxu0
    %v1604 = vpop.f32.mrb[0].mxu0
    %v1605 = vadd.f32 %v1564, %v1604
    %v1606 = vpop.f32.mrb[0].mxu0
    %1607 = vdwg.mxu0
    %vm1608 = vcmask 64512
    %1609 = vst.msk [vmem:[%s5] sm:$0xff] %vm1608, %v1602
    %1610 = vst.msk [vmem:[%s5 + $0x8] sm:$0xff] %vm1608, %v1605
    // Predicated region
    $region26: #{tpu_custom_call.1} parent=1 // pred_check
      _
    $region27: #{tpu_custom_call.1} parent=1 // pred_check_branch
      %1612 = sbr.rel (0) target = $region29
    $region28: #{tpu_custom_call.1} parent=1 // pred_region
      _
    $region29: #{tpu_custom_call.1} parent=1 // pred_fallthru
      _
    // Predicated region
    $region30: #{tpu_custom_call.1} parent=1 // pred_check
      _
    $region31: #{tpu_custom_call.1} parent=1 // pred_check_branch
      %1614 = sbr.rel (0) target = $region33
    $region32: #{tpu_custom_call.1} parent=1 // pred_region
      _
    $region33: #{tpu_custom_call.1} parent=1 // pred_fallthru
      _
    %1615 = vsyncpa [#allocation3], 1

</llo_original>
